<compile_context>
chip_gen: v6e
topology: v6e:2x2x1
jax: 0.10.0
libtpu: 0.0.40
codegen_flags: <defaults>
</compile_context>

<pallas_src>
import functools

import jax
import jax.numpy as jnp
from jax import lax
from jax.experimental import pallas as pl
from jax.experimental.pallas import tpu as pltpu

_NEG_BIG = -1e30  # large-negative mask value; exp underflows cleanly to 0 in f32


def _round_up(x: int, m: int) -> int:
    return -(-x // m) * m


def _device_kind() -> str:
    try:
        return jax.devices()[0].device_kind.lower()
    except Exception:  # pragma: no cover - defensive
        return ""


def _preferred_row_tile() -> int:
    # v2-v5 class MXUs are 128-tall; v6e/v7x have 2x256x256 MXUs -> 256 rows.
    kind = _device_kind()
    if any(t in kind for t in ("v2", "v3", "v4", "v5")):
        return 128
    return 256


def _vmem_limit_bytes() -> int:
    # v5e/v6e: 128 MiB physical VMEM -> allow ~96 MiB scoped.
    # v7x / unknown: 64 MiB physical per TensorCore -> cap at 48 MiB.
    kind = _device_kind()
    if any(t in kind for t in ("v5", "v6")):
        return 96 * 1024 * 1024
    return 48 * 1024 * 1024


def _npair_stream_kernel(a_ref, p_ref, bias_ref, out_ref,
                         m_sc, l_sc, acc_sc, *,
                         reg_lambda, n_actual, tile,
                         mask_cols, mask_rows, use_bf16_matmul):
    """Grid step (i, j): anchor row-tile i against positives column-tile j."""
    i = pl.program_id(0)
    j = pl.program_id(1)
    nj = pl.num_programs(1)

    # --- per-row-tile init (column axis is innermost) -----------------------
    @pl.when(j == 0)
    def _init():
        m_sc[...] = jnp.full_like(m_sc, _NEG_BIG)
        l_sc[...] = jnp.zeros_like(l_sc)
        acc_sc[...] = jnp.zeros_like(acc_sc)

    a = a_ref[...]            # (tile, d_pad) anchors, original dtype
    p = p_ref[...]            # (tile, d_pad) positives column tile

    if use_bf16_matmul and a.dtype == jnp.float32:
        a_mm = a.astype(jnp.bfloat16)
        p_mm = p.astype(jnp.bfloat16)
    else:
        a_mm, p_mm = a, p

    # logits tile = anchors @ positives^T, contracting the last dims directly
    # (no explicit transpose / relayout), f32 accumulation on the MXU.
    logits = lax.dot_general(
        a_mm, p_mm,
        dimension_numbers=(((1,), (1,)), ((), ())),
        preferred_element_type=jnp.float32)                       # (tile, tile)

    if mask_cols:
        # additive bias row: 0 for real columns, -1e30 for padded columns
        logits = logits + bias_ref[...]                            # (1, tile) bcast

    # --- online (flash-style) logsumexp over column tiles --------------------
    m_prev = m_sc[...]                                             # (tile, 1)
    m_new = jnp.maximum(m_prev, jnp.max(logits, axis=-1, keepdims=True))
    alpha = jnp.exp(m_prev - m_new)
    l_sc[...] = alpha * l_sc[...] + jnp.sum(jnp.exp(logits - m_new),
                                            axis=-1, keepdims=True)
    m_sc[...] = m_new

    # --- diagonal + L2 terms: only where the column tile aligns with the rows
    @pl.when(j == i)
    def _diag_l2():
        diag = jnp.sum(a * p, axis=-1, keepdims=True, dtype=jnp.float32)
        l2 = (jnp.sum(a * a, axis=-1, keepdims=True, dtype=jnp.float32)
              + jnp.sum(p * p, axis=-1, keepdims=True, dtype=jnp.float32))
        acc_sc[...] = (reg_lambda * 0.25) * l2 - diag

    # --- finalize: one (tile, 1) write per row tile ---------------------------
    @pl.when(j == nj - 1)
    def _finalize():
        lse = m_sc[...] + jnp.log(l_sc[...])                       # (tile, 1)
        terms = lse + acc_sc[...]
        if mask_rows:
            row_ids = lax.broadcasted_iota(jnp.int32, terms.shape, 0) + i * tile
            terms = jnp.where(row_ids < n_actual, terms, 0.0)
        out_ref[...] = terms


def npair_loss(anchors: jax.Array, positives: jax.Array,
               reg_lambda: float = 0.002, row_tile: int | None = None,
               use_bf16_matmul: bool = False) -> jax.Array:
    """Pallas TPU implementation of NPairLoss.forward((anchors, positives))."""
    assert anchors.shape == positives.shape and anchors.ndim == 2
    n, d = anchors.shape

    if row_tile is None:
        row_tile = _preferred_row_tile()
    tile = max(128, _round_up(row_tile, 128))     # multiple of 128 (lane-dense)
    tile = min(tile, _round_up(n, 128))           # don't exceed padded N
    n_pad = _round_up(n, tile)
    d_pad = _round_up(d, 128)

    if (n_pad, d_pad) != (n, d):
        anchors = jnp.pad(anchors, ((0, n_pad - n), (0, d_pad - d)))
        positives = jnp.pad(positives, ((0, n_pad - n), (0, d_pad - d)))

    mask_cols = n_pad != n
    mask_rows = n_pad != n

    # Additive column-mask bias: 0 for real positives, -1e30 for padded ones.
    col_bias = jnp.where(jnp.arange(n_pad) < n, 0.0, _NEG_BIG)
    col_bias = col_bias.astype(jnp.float32)[None, :]               # (1, n_pad)

    num_tiles = n_pad // tile
    grid = (num_tiles, num_tiles)                  # (row tiles, column tiles)

    kernel = functools.partial(
        _npair_stream_kernel,
        reg_lambda=float(reg_lambda), n_actual=n, tile=tile,
        mask_cols=mask_cols, mask_rows=mask_rows,
        use_bf16_matmul=use_bf16_matmul)

    partials = pl.pallas_call(
        kernel,
        out_shape=jax.ShapeDtypeStruct((n_pad, 1), jnp.float32),
        grid_spec=pltpu.PrefetchScalarGridSpec(
            num_scalar_prefetch=0,
            grid=grid,
            in_specs=[
                # anchor row tile: constant across j -> fetched once per row tile
                pl.BlockSpec((tile, d_pad), lambda i, j: (i, 0)),
                # positives column tile: streamed (double-buffered) along j
                pl.BlockSpec((tile, d_pad), lambda i, j: (j, 0)),
                # additive column-mask bias row
                pl.BlockSpec((1, tile), lambda i, j: (0, j)),
            ],
            out_specs=pl.BlockSpec((tile, 1), lambda i, j: (i, 0)),
            scratch_shapes=[pltpu.VMEM((tile, 1), jnp.float32)] * 3,  # m, l, acc
        ),
        compiler_params=pltpu.CompilerParams(
            dimension_semantics=("parallel", "arbitrary"),
            vmem_limit_bytes=_vmem_limit_bytes()),
    )(anchors, positives, col_bias)

    # Tiny final reduce + mean over the true batch size in plain JAX.
    return jnp.sum(partials) / jnp.float32(n)


def _reference_npair_loss(anchors, positives, reg_lambda=0.002):
    a = anchors.astype(jnp.float32)
    p = positives.astype(jnp.float32)
    logits = a @ p.T
    lse = jax.scipy.special.logsumexp(logits, axis=-1)
    diag = jnp.diagonal(logits)
    ce = jnp.mean(lse - diag)
    reg = reg_lambda * 0.25 * (jnp.mean(jnp.sum(a * a, -1))
                               + jnp.mean(jnp.sum(p * p, -1)))
    return ce + reg


if __name__ == "__main__":
    key = jax.random.PRNGKey(0)
    k_a, k_p, k_a2, k_p2 = jax.random.split(key, 4)

    # Small case matching the module's intended use (batch of embedding pairs).
    N, D = 8, 32
    anchors = jax.random.normal(k_a, (N, D), dtype=jnp.float32)
    positives = jax.random.normal(k_p, (N, D), dtype=jnp.float32)
    loss = jax.block_until_ready(npair_loss(anchors, positives, reg_lambda=0.002))
    ref = _reference_npair_loss(anchors, positives, reg_lambda=0.002)
    assert jnp.allclose(loss, ref, rtol=1e-4, atol=1e-4), (loss, ref)

    # A case that exercises multi-tile column streaming / online logsumexp
    # (force tile=128 so n_pad=256 gives a 2x2 grid on every generation).
    N2, D2 = 160, 48
    anchors2 = jax.random.normal(k_a2, (N2, D2), dtype=jnp.float32)
    positives2 = jax.random.normal(k_p2, (N2, D2), dtype=jnp.float32)
    loss2 = jax.block_until_ready(
        npair_loss(anchors2, positives2, reg_lambda=0.002, row_tile=128))
    ref2 = _reference_npair_loss(anchors2, positives2, reg_lambda=0.002)
    assert jnp.allclose(loss2, ref2, rtol=1e-4, atol=1e-4), (loss2, ref2)

    print("KERNEL_OK")
</pallas_src>

<mosaic_0001>
module attributes {stable_mosaic.version = 11 : i64} {
  func.func @_npair_stream_kernel(%arg0: i32, %arg1: i32, %arg2: memref<128x128xf32, #tpu.memory_space<vmem>>, %arg3: memref<128x128xf32, #tpu.memory_space<vmem>>, %arg4: memref<1x128xf32, #tpu.memory_space<vmem>>, %arg5: memref<128x1xf32, #tpu.memory_space<vmem>>, %arg6: memref<128x1xf32, #tpu.memory_space<vmem>>, %arg7: memref<128x1xf32, #tpu.memory_space<vmem>>, %arg8: memref<128x1xf32, #tpu.memory_space<vmem>>) attributes {dimension_semantics = [#tpu.dimension_semantics<parallel>, #tpu.dimension_semantics<arbitrary>], iteration_bounds = array<i64: 1, 1>, scalar_prefetch = 0 : i64, scratch_operands = 3 : i64, tpu.core_type = #tpu.core_type<tc>, window_params = [{transform_indices = @transform_0, window_bounds = array<i64: 128, 128>}, {transform_indices = @transform_1, window_bounds = array<i64: 128, 128>}, {transform_indices = @transform_2, window_bounds = array<i64: 1, 128>}, {transform_indices = @transform_3, window_bounds = array<i64: 128, 1>}]} {
    %c0_i32 = arith.constant 0 : i32
    %0 = arith.cmpi eq, %arg1, %c0_i32 : i32
    %1 = arith.extui %0 : i1 to i32
    %c0_i32_0 = arith.constant 0 : i32
    %2 = arith.cmpi ne, %1, %c0_i32_0 : i32
    scf.if %2 {
      %cst_19 = arith.constant -1.000000e+30 : f32
      %31 = vector.broadcast %cst_19 : f32 to vector<128x1xf32>
      %c0_20 = arith.constant 0 : index
      %c0_21 = arith.constant 0 : index
      %32 = vector.load %arg6[%c0_20, %c0_21] : memref<128x1xf32, #tpu.memory_space<vmem>>, vector<128x1xf32>
      tpu.vector_store %arg6[%c0_20, %c0_21], %31 {strides = array<i32>} : memref<128x1xf32, #tpu.memory_space<vmem>>, vector<128x1xf32>,
      %cst_22 = arith.constant 0.000000e+00 : f32
      %33 = vector.broadcast %cst_22 : f32 to vector<128x1xf32>
      %c0_23 = arith.constant 0 : index
      %c0_24 = arith.constant 0 : index
      %34 = vector.load %arg7[%c0_23, %c0_24] : memref<128x1xf32, #tpu.memory_space<vmem>>, vector<128x1xf32>
      tpu.vector_store %arg7[%c0_23, %c0_24], %33 {strides = array<i32>} : memref<128x1xf32, #tpu.memory_space<vmem>>, vector<128x1xf32>,
      %cst_25 = arith.constant 0.000000e+00 : f32
      %35 = vector.broadcast %cst_25 : f32 to vector<128x1xf32>
      %c0_26 = arith.constant 0 : index
      %c0_27 = arith.constant 0 : index
      %36 = vector.load %arg8[%c0_26, %c0_27] : memref<128x1xf32, #tpu.memory_space<vmem>>, vector<128x1xf32>
      tpu.vector_store %arg8[%c0_26, %c0_27], %35 {strides = array<i32>} : memref<128x1xf32, #tpu.memory_space<vmem>>, vector<128x1xf32>,
    } else {
    }
    %c0 = arith.constant 0 : index
    %c0_1 = arith.constant 0 : index
    %3 = vector.load %arg2[%c0, %c0_1] : memref<128x128xf32, #tpu.memory_space<vmem>>, vector<128x128xf32>
    %c0_2 = arith.constant 0 : index
    %c0_3 = arith.constant 0 : index
    %4 = vector.load %arg3[%c0_2, %c0_3] : memref<128x128xf32, #tpu.memory_space<vmem>>, vector<128x128xf32>
    %cst = arith.constant dense<0.000000e+00> : vector<128x128xf32>
    %5 = tpu.matmul %3, %4, %cst {dimension_numbers = #tpu.dot_dimension_numbers<[1], [1], [0], [0], [0, 0, 1, 0], [], []>} : vector<128x128xf32>, vector<128x128xf32>, vector<128x128xf32> -> vector<128x128xf32>
    %c0_4 = arith.constant 0 : index
    %c0_5 = arith.constant 0 : index
    %6 = vector.load %arg4[%c0_4, %c0_5] : memref<1x128xf32, #tpu.memory_space<vmem>>, vector<1x128xf32>
    %7 = vector.broadcast %6 : vector<1x128xf32> to vector<128x128xf32>
    %8 = arith.addf %5, %7 : vector<128x128xf32>
    %c0_6 = arith.constant 0 : index
    %c0_7 = arith.constant 0 : index
    %9 = vector.load %arg6[%c0_6, %c0_7] : memref<128x1xf32, #tpu.memory_space<vmem>>, vector<128x1xf32>
    %cst_8 = arith.constant dense<0xFF800000> : vector<128xf32>
    %10 = vector.multi_reduction <maximumf>, %8, %cst_8 [1] : vector<128x128xf32> to vector<128xf32>
    %11 = vector.shape_cast %10 : vector<128xf32> to vector<128x1xf32>
    %12 = arith.maximumf %9, %11 : vector<128x1xf32>
    %13 = arith.subf %9, %12 : vector<128x1xf32>
    %14 = math.exp %13 : vector<128x1xf32>
    %c0_9 = arith.constant 0 : index
    %c0_10 = arith.constant 0 : index
    %15 = vector.load %arg7[%c0_9, %c0_10] : memref<128x1xf32, #tpu.memory_space<vmem>>, vector<128x1xf32>
    %16 = arith.mulf %14, %15 : vector<128x1xf32>
    %17 = vector.broadcast %12 : vector<128x1xf32> to vector<128x128xf32>
    %18 = arith.subf %8, %17 : vector<128x128xf32>
    %19 = math.exp %18 : vector<128x128xf32>
    %cst_11 = arith.constant dense<0.000000e+00> : vector<128xf32>
    %20 = vector.multi_reduction <add>, %19, %cst_11 [1] : vector<128x128xf32> to vector<128xf32>
    %21 = vector.shape_cast %20 : vector<128xf32> to vector<128x1xf32>
    %22 = arith.addf %16, %21 : vector<128x1xf32>
    %c0_12 = arith.constant 0 : index
    %c0_13 = arith.constant 0 : index
    %23 = vector.load %arg7[%c0_12, %c0_13] : memref<128x1xf32, #tpu.memory_space<vmem>>, vector<128x1xf32>
    tpu.vector_store %arg7[%c0_12, %c0_13], %22 {strides = array<i32>} : memref<128x1xf32, #tpu.memory_space<vmem>>, vector<128x1xf32>,
    %c0_14 = arith.constant 0 : index
    %c0_15 = arith.constant 0 : index
    %24 = vector.load %arg6[%c0_14, %c0_15] : memref<128x1xf32, #tpu.memory_space<vmem>>, vector<128x1xf32>
    tpu.vector_store %arg6[%c0_14, %c0_15], %12 {strides = array<i32>} : memref<128x1xf32, #tpu.memory_space<vmem>>, vector<128x1xf32>,
    %25 = arith.cmpi eq, %arg1, %arg0 : i32
    %26 = arith.extui %25 : i1 to i32
    %c0_i32_16 = arith.constant 0 : i32
    %27 = arith.cmpi ne, %26, %c0_i32_16 : i32
    scf.if %27 {
      %31 = arith.mulf %3, %4 : vector<128x128xf32>
      %cst_19 = arith.constant dense<0.000000e+00> : vector<128xf32>
      %32 = vector.multi_reduction <add>, %31, %cst_19 [1] : vector<128x128xf32> to vector<128xf32>
      %33 = vector.shape_cast %32 : vector<128xf32> to vector<128x1xf32>
      %34 = arith.mulf %3, %3 : vector<128x128xf32>
      %cst_20 = arith.constant dense<0.000000e+00> : vector<128xf32>
      %35 = vector.multi_reduction <add>, %34, %cst_20 [1] : vector<128x128xf32> to vector<128xf32>
      %36 = vector.shape_cast %35 : vector<128xf32> to vector<128x1xf32>
      %37 = arith.mulf %4, %4 : vector<128x128xf32>
      %cst_21 = arith.constant dense<0.000000e+00> : vector<128xf32>
      %38 = vector.multi_reduction <add>, %37, %cst_21 [1] : vector<128x128xf32> to vector<128xf32>
      %39 = vector.shape_cast %38 : vector<128xf32> to vector<128x1xf32>
      %40 = arith.addf %36, %39 : vector<128x1xf32>
      %cst_22 = arith.constant 5.000000e-04 : f32
      %41 = vector.broadcast %cst_22 : f32 to vector<128x1xf32>
      %42 = arith.mulf %41, %40 : vector<128x1xf32>
      %43 = arith.subf %42, %33 : vector<128x1xf32>
      %c0_23 = arith.constant 0 : index
      %c0_24 = arith.constant 0 : index
      %44 = vector.load %arg8[%c0_23, %c0_24] : memref<128x1xf32, #tpu.memory_space<vmem>>, vector<128x1xf32>
      tpu.vector_store %arg8[%c0_23, %c0_24], %43 {strides = array<i32>} : memref<128x1xf32, #tpu.memory_space<vmem>>, vector<128x1xf32>,
    } else {
    }
    %c0_i32_17 = arith.constant 0 : i32
    %28 = arith.cmpi eq, %arg1, %c0_i32_17 : i32
    %29 = arith.extui %28 : i1 to i32
    %c0_i32_18 = arith.constant 0 : i32
    %30 = arith.cmpi ne, %29, %c0_i32_18 : i32
    scf.if %30 {
      %c0_19 = arith.constant 0 : index
      %c0_20 = arith.constant 0 : index
      %31 = vector.load %arg6[%c0_19, %c0_20] : memref<128x1xf32, #tpu.memory_space<vmem>>, vector<128x1xf32>
      %c0_21 = arith.constant 0 : index
      %c0_22 = arith.constant 0 : index
      %32 = vector.load %arg7[%c0_21, %c0_22] : memref<128x1xf32, #tpu.memory_space<vmem>>, vector<128x1xf32>
      %33 = math.log %32 : vector<128x1xf32>
      %34 = arith.addf %31, %33 : vector<128x1xf32>
      %c0_23 = arith.constant 0 : index
      %c0_24 = arith.constant 0 : index
      %35 = vector.load %arg8[%c0_23, %c0_24] : memref<128x1xf32, #tpu.memory_space<vmem>>, vector<128x1xf32>
      %36 = arith.addf %34, %35 : vector<128x1xf32>
      %37 = tpu.iota {dimensions = array<i32: 0>} : vector<128x1xi32>
      %c128_i32 = arith.constant 128 : i32
      %38 = arith.muli %arg0, %c128_i32 : i32
      %39 = vector.broadcast %38 : i32 to vector<128x1xi32>
      %40 = arith.addi %37, %39 : vector<128x1xi32>
      %c8_i32 = arith.constant 8 : i32
      %41 = vector.broadcast %c8_i32 : i32 to vector<128x1xi32>
      %42 = arith.cmpi slt, %40, %41 : vector<128x1xi32>
      %cst_25 = arith.constant 0.000000e+00 : f32
      %43 = vector.broadcast %cst_25 : f32 to vector<128x1xf32>
      %44 = arith.select %42, %36, %43 : vector<128x1xi1>, vector<128x1xf32>
      %c0_26 = arith.constant 0 : index
      %c0_27 = arith.constant 0 : index
      %45 = vector.load %arg5[%c0_26, %c0_27] : memref<128x1xf32, #tpu.memory_space<vmem>>, vector<128x1xf32>
      tpu.vector_store %arg5[%c0_26, %c0_27], %44 {strides = array<i32>} : memref<128x1xf32, #tpu.memory_space<vmem>>, vector<128x1xf32>,
    } else {
    }
    return
  }
  func.func @transform_0(%arg0: i32, %arg1: i32) -> (i32, i32) {
    %c0_i32 = arith.constant 0 : i32
    %c0_i32_0 = arith.constant 0 : i32
    return %arg0, %c0_i32 : i32, i32
  }
  func.func @transform_1(%arg0: i32, %arg1: i32) -> (i32, i32) {
    %c0_i32 = arith.constant 0 : i32
    %c0_i32_0 = arith.constant 0 : i32
    return %arg1, %c0_i32 : i32, i32
  }
  func.func @transform_2(%arg0: i32, %arg1: i32) -> (i32, i32) {
    %c0_i32 = arith.constant 0 : i32
    %c0_i32_0 = arith.constant 0 : i32
    return %c0_i32, %arg1 : i32, i32
  }
  func.func @transform_3(%arg0: i32, %arg1: i32) -> (i32, i32) {
    %c0_i32 = arith.constant 0 : i32
    %c0_i32_0 = arith.constant 0 : i32
    return %arg0, %c0_i32 : i32, i32
  }
}

</mosaic_0001>

<llo_original>
// kernel: tpu_custom_call.1
$region0: #{tpu_custom_call.1}
  #allocation0 [shape = 'u32[]', space=smem, size = 0x4, offset = 0x4, fixed_abs, tag = 'smem constant byte address 0x4 - core index']
  #allocation1 [shape = 'u32[144,128]{1,0:T(1,128)}', space=vmem, size = 0x12000, scoped, tag = 'internal scratch']
  #allocation2 [shape = 'f32[128,1]{1,0:T(8,128)}', space=vmem, size = 0x10000, scoped, tag = 'scratch operand']
  #allocation3 [shape = 'f32[128,1]{1,0:T(8,128)}', space=vmem, size = 0x10000, scoped, tag = 'scratch operand']
  #allocation4 [shape = 'f32[128,1]{1,0:T(8,128)}', space=vmem, size = 0x10000, scoped, tag = 'scratch operand']
  %s0 = inlined_call_operand.hbm [shape: f32[128,128], index: 0, kind: input, shape index: {}]
  %s1 = inlined_call_operand.hbm [shape: f32[128,128], index: 1, kind: input, shape index: {}]
  %s2 = inlined_call_operand.vmem [shape: f32[1,128], index: 2, kind: input, shape index: {}]
  %s3 = inlined_call_operand.vmem [shape: f32[128,1], index: 3, kind: output, shape index: {}]
  %s4 = sld [smem:[#allocation0]]
  $region42: #{tpu_custom_call.1} parent=0
    _
  %s6 = ssub.s32 1, %s4
  %s7 = scalar_select 0, %s6, %s4
  $region1: #{tpu_custom_call.1} parent=0
    #allocation5 [shape = 'u8[65536]{0}', space=vmem, size = 0x10000, scoped, tag = 'input window, operand 0, single buffered']
    #allocation6 [shape = 's32[1]{0}', space=sflag, size = 0x4, scoped, tag = 'scoped memory for tpu_custom_call.1']
    #allocation7 [shape = 'u8[65536]{0}', space=vmem, size = 0x10000, scoped, tag = 'input window, operand 1, single buffered']
    #allocation8 [shape = 's32[1]{0}', space=sflag, size = 0x4, scoped, tag = 'scoped memory for tpu_custom_call.1']
    %8 = vsyncpa [#allocation6], 0
    %9 = vsyncpa [#allocation8], 0
    // Predicated region
    $region2: #{tpu_custom_call.1} parent=1 // pred_check
      _
    $region3: #{tpu_custom_call.1} parent=1 // pred_check_branch
      %11 = sbr.rel (0) target = $region5
    $region4: #{tpu_custom_call.1} parent=1 // pred_region
      %s13 = ssub.s32 2048, 2048
      %14 = vsyncadd [#allocation6], %s13
      %s15 = sshll.u32 [#allocation5], 4
      %s16 = int_to_ptr.vmem [resolvable:$true] %s15
      %21 = dma.hbm_to_vmem [thread:$0]  %s0, 2048, %s16, [#allocation6], 128, 128, 8
    $region5: #{tpu_custom_call.1} parent=1 // pred_fallthru
      _
    // Predicated region
    $region6: #{tpu_custom_call.1} parent=1 // pred_check
      _
    $region7: #{tpu_custom_call.1} parent=1 // pred_check_branch
      %23 = sbr.rel (0) target = $region9
    $region8: #{tpu_custom_call.1} parent=1 // pred_region
      %s25 = ssub.s32 2048, 2048
      %26 = vsyncadd [#allocation8], %s25
      %s27 = sshll.u32 [#allocation7], 4
      %s28 = int_to_ptr.vmem [resolvable:$true] %s27
      %33 = dma.hbm_to_vmem [thread:$0]  %s1, 2048, %s28, [#allocation8], 128, 128, 8
    $region9: #{tpu_custom_call.1} parent=1 // pred_fallthru
      _
    // Predicated region
    $region10: #{tpu_custom_call.1} parent=1 // pred_check
      _
    $region11: #{tpu_custom_call.1} parent=1 // pred_check_branch
      %35 = sbr.rel (0) target = $region13
    $region12: #{tpu_custom_call.1} parent=1 // pred_region
      _
    $region13: #{tpu_custom_call.1} parent=1 // pred_fallthru
      _
    // Predicated region
    $region14: #{tpu_custom_call.1} parent=1 // pred_check
      _
    $region15: #{tpu_custom_call.1} parent=1 // pred_check_branch
      %37 = sbr.rel (0) target = $region17
    $region16: #{tpu_custom_call.1} parent=1 // pred_region
      %38 = dma.done [#allocation6], 2048
    $region17: #{tpu_custom_call.1} parent=1 // pred_fallthru
      _
    // Predicated region
    $region18: #{tpu_custom_call.1} parent=1 // pred_check
      _
    $region19: #{tpu_custom_call.1} parent=1 // pred_check_branch
      %40 = sbr.rel (0) target = $region21
    $region20: #{tpu_custom_call.1} parent=1 // pred_region
      %41 = dma.done [#allocation8], 2048
    $region21: #{tpu_custom_call.1} parent=1 // pred_fallthru
      _
    %p42 = scmp.eq.s32.totalorder 0, 0
    // Predicated region
    $region22: #{tpu_custom_call.1} parent=1 // pred_check
      %p43 = pneg %p42
    $region23: #{tpu_custom_call.1} parent=1 // pred_check_branch
      %45 = sbr.rel (%p43) target = $region25
    $region24: #{tpu_custom_call.1} parent=1 // pred_region
      %vm46 = vcmask 7168
      %47 = vst.msk [vmem:[#allocation2] sm:$0xff] %vm46, -1e+30
      %48 = vst.msk [vmem:[#allocation2 + $0x8] sm:$0xff] %vm46, -1e+30
      %49 = vst.msk [vmem:[#allocation2 + $0x10] sm:$0xff] %vm46, -1e+30
      %50 = vst.msk [vmem:[#allocation2 + $0x18] sm:$0xff] %vm46, -1e+30
      %51 = vst.msk [vmem:[#allocation2 + $0x20] sm:$0xff] %vm46, -1e+30
      %52 = vst.msk [vmem:[#allocation2 + $0x28] sm:$0xff] %vm46, -1e+30
      %53 = vst.msk [vmem:[#allocation2 + $0x30] sm:$0xff] %vm46, -1e+30
      %54 = vst.msk [vmem:[#allocation2 + $0x38] sm:$0xff] %vm46, -1e+30
      %55 = vst.msk [vmem:[#allocation2 + $0x40] sm:$0xff] %vm46, -1e+30
      %56 = vst.msk [vmem:[#allocation2 + $0x48] sm:$0xff] %vm46, -1e+30
      %57 = vst.msk [vmem:[#allocation2 + $0x50] sm:$0xff] %vm46, -1e+30
      %58 = vst.msk [vmem:[#allocation2 + $0x58] sm:$0xff] %vm46, -1e+30
      %59 = vst.msk [vmem:[#allocation2 + $0x60] sm:$0xff] %vm46, -1e+30
      %60 = vst.msk [vmem:[#allocation2 + $0x68] sm:$0xff] %vm46, -1e+30
      %61 = vst.msk [vmem:[#allocation2 + $0x70] sm:$0xff] %vm46, -1e+30
      %62 = vst.msk [vmem:[#allocation2 + $0x78] sm:$0xff] %vm46, -1e+30
      %63 = vst.msk [vmem:[#allocation3] sm:$0xff] %vm46, 0.0
      %64 = vst.msk [vmem:[#allocation3 + $0x8] sm:$0xff] %vm46, 0.0
      %65 = vst.msk [vmem:[#allocation3 + $0x10] sm:$0xff] %vm46, 0.0
      %66 = vst.msk [vmem:[#allocation3 + $0x18] sm:$0xff] %vm46, 0.0
      %67 = vst.msk [vmem:[#allocation3 + $0x20] sm:$0xff] %vm46, 0.0
      %68 = vst.msk [vmem:[#allocation3 + $0x28] sm:$0xff] %vm46, 0.0
      %69 = vst.msk [vmem:[#allocation3 + $0x30] sm:$0xff] %vm46, 0.0
      %70 = vst.msk [vmem:[#allocation3 + $0x38] sm:$0xff] %vm46, 0.0
      %71 = vst.msk [vmem:[#allocation3 + $0x40] sm:$0xff] %vm46, 0.0
      %72 = vst.msk [vmem:[#allocation3 + $0x48] sm:$0xff] %vm46, 0.0
      %73 = vst.msk [vmem:[#allocation3 + $0x50] sm:$0xff] %vm46, 0.0
      %74 = vst.msk [vmem:[#allocation3 + $0x58] sm:$0xff] %vm46, 0.0
      %75 = vst.msk [vmem:[#allocation3 + $0x60] sm:$0xff] %vm46, 0.0
      %76 = vst.msk [vmem:[#allocation3 + $0x68] sm:$0xff] %vm46, 0.0
      %77 = vst.msk [vmem:[#allocation3 + $0x70] sm:$0xff] %vm46, 0.0
      %78 = vst.msk [vmem:[#allocation3 + $0x78] sm:$0xff] %vm46, 0.0
      %79 = vst.msk [vmem:[#allocation4] sm:$0xff] %vm46, 0.0
      %80 = vst.msk [vmem:[#allocation4 + $0x8] sm:$0xff] %vm46, 0.0
      %81 = vst.msk [vmem:[#allocation4 + $0x10] sm:$0xff] %vm46, 0.0
      %82 = vst.msk [vmem:[#allocation4 + $0x18] sm:$0xff] %vm46, 0.0
      %83 = vst.msk [vmem:[#allocation4 + $0x20] sm:$0xff] %vm46, 0.0
      %84 = vst.msk [vmem:[#allocation4 + $0x28] sm:$0xff] %vm46, 0.0
      %85 = vst.msk [vmem:[#allocation4 + $0x30] sm:$0xff] %vm46, 0.0
      %86 = vst.msk [vmem:[#allocation4 + $0x38] sm:$0xff] %vm46, 0.0
      %87 = vst.msk [vmem:[#allocation4 + $0x40] sm:$0xff] %vm46, 0.0
      %88 = vst.msk [vmem:[#allocation4 + $0x48] sm:$0xff] %vm46, 0.0
      %89 = vst.msk [vmem:[#allocation4 + $0x50] sm:$0xff] %vm46, 0.0
      %90 = vst.msk [vmem:[#allocation4 + $0x58] sm:$0xff] %vm46, 0.0
      %91 = vst.msk [vmem:[#allocation4 + $0x60] sm:$0xff] %vm46, 0.0
      %92 = vst.msk [vmem:[#allocation4 + $0x68] sm:$0xff] %vm46, 0.0
      %93 = vst.msk [vmem:[#allocation4 + $0x70] sm:$0xff] %vm46, 0.0
      %94 = vst.msk [vmem:[#allocation4 + $0x78] sm:$0xff] %vm46, 0.0
    $region25: #{tpu_custom_call.1} parent=1 // pred_fallthru
      _
    %v95 = vld [vmem:[#allocation5] sm:$0xff]
    %v96 = vld [vmem:[#allocation5 + $0x8] sm:$0xff]
    %v97 = vld [vmem:[#allocation5 + $0x10] sm:$0xff]
    %v98 = vld [vmem:[#allocation5 + $0x18] sm:$0xff]
    %v99 = vld [vmem:[#allocation5 + $0x20] sm:$0xff]
    %v100 = vld [vmem:[#allocation5 + $0x28] sm:$0xff]
    %v101 = vld [vmem:[#allocation5 + $0x30] sm:$0xff]
    %v102 = vld [vmem:[#allocation5 + $0x38] sm:$0xff]
    %v103 = vld [vmem:[#allocation5 + $0x40] sm:$0xff]
    %v104 = vld [vmem:[#allocation5 + $0x48] sm:$0xff]
    %v105 = vld [vmem:[#allocation5 + $0x50] sm:$0xff]
    %v106 = vld [vmem:[#allocation5 + $0x58] sm:$0xff]
    %v107 = vld [vmem:[#allocation5 + $0x60] sm:$0xff]
    %v108 = vld [vmem:[#allocation5 + $0x68] sm:$0xff]
    %v109 = vld [vmem:[#allocation5 + $0x70] sm:$0xff]
    %v110 = vld [vmem:[#allocation5 + $0x78] sm:$0xff]
    %v111 = vld [vmem:[#allocation7] sm:$0xff]
    %v112 = vld [vmem:[#allocation7 + $0x8] sm:$0xff]
    %v113 = vld [vmem:[#allocation7 + $0x10] sm:$0xff]
    %v114 = vld [vmem:[#allocation7 + $0x18] sm:$0xff]
    %v115 = vld [vmem:[#allocation7 + $0x20] sm:$0xff]
    %v116 = vld [vmem:[#allocation7 + $0x28] sm:$0xff]
    %v117 = vld [vmem:[#allocation7 + $0x30] sm:$0xff]
    %v118 = vld [vmem:[#allocation7 + $0x38] sm:$0xff]
    %v119 = vld [vmem:[#allocation7 + $0x40] sm:$0xff]
    %v120 = vld [vmem:[#allocation7 + $0x48] sm:$0xff]
    %v121 = vld [vmem:[#allocation7 + $0x50] sm:$0xff]
    %v122 = vld [vmem:[#allocation7 + $0x58] sm:$0xff]
    %v123 = vld [vmem:[#allocation7 + $0x60] sm:$0xff]
    %v124 = vld [vmem:[#allocation7 + $0x68] sm:$0xff]
    %v125 = vld [vmem:[#allocation7 + $0x70] sm:$0xff]
    %v126 = vld [vmem:[#allocation7 + $0x78] sm:$0xff]
    %v127 = vld [vmem:[%s2] sm:$0x1]
    %v129 = vlaneseq
    %v130 = vshrl.u32 %v129, 7
    %v131 = vsub.s32 0, %v130
    %v132 = vrot.slane %v127, %v131
    %134 = vmatprep.subr.mxu0 0.0
    %135 = vmatpush1.xpose.msra.mxu0 %v126
    %136 = vmatprep.subr.mxu0 0.0
    %137 = vmatpush1.xpose.msra.mxu0 %v125
    %138 = vmatprep.subr.mxu0 0.0
    %139 = vmatpush1.xpose.msra.mxu0 %v124
    %140 = vmatprep.subr.mxu0 0.0
    %141 = vmatpush1.xpose.msra.mxu0 %v123
    %142 = vmatprep.subr.mxu0 0.0
    %143 = vmatpush1.xpose.msra.mxu0 %v122
    %144 = vmatprep.subr.mxu0 0.0
    %145 = vmatpush1.xpose.msra.mxu0 %v121
    %146 = vmatprep.subr.mxu0 0.0
    %147 = vmatpush1.xpose.msra.mxu0 %v120
    %148 = vmatprep.subr.mxu0 0.0
    %149 = vmatpush1.xpose.msra.mxu0 %v119
    %150 = vmatprep.subr.mxu0 0.0
    %151 = vmatpush1.xpose.msra.mxu0 %v118
    %152 = vmatprep.subr.mxu0 0.0
    %153 = vmatpush1.xpose.msra.mxu0 %v117
    %154 = vmatprep.subr.mxu0 0.0
    %155 = vmatpush1.xpose.msra.mxu0 %v116
    %156 = vmatprep.subr.mxu0 0.0
    %157 = vmatpush1.xpose.msra.mxu0 %v115
    %158 = vmatprep.subr.mxu0 0.0
    %159 = vmatpush1.xpose.msra.mxu0 %v114
    %160 = vmatprep.subr.mxu0 0.0
    %161 = vmatpush1.xpose.msra.mxu0 %v113
    %162 = vmatprep.subr.mxu0 0.0
    %163 = vmatpush1.xpose.msra.mxu0 %v112
    %164 = vmatprep.subr.mxu0 0.0
    %165 = vmatpush1.xpose.msra.mxu0 %v111
    %166 = vmatprep.subr.mxu0 0.0
    %167 = vmatpush2.xpose.msra.mxu0 0.0
    %168 = vmatprep.subr.mxu0 0.0
    %169 = vmatpush2.xpose.msra.mxu0 0.0
    %170 = vmatprep.subr.mxu0 0.0
    %171 = vmatpush2.xpose.msra.mxu0 0.0
    %172 = vmatprep.subr.mxu0 0.0
    %173 = vmatpush2.xpose.msra.mxu0 0.0
    %174 = vmatprep.subr.mxu0 0.0
    %175 = vmatpush2.xpose.msra.mxu0 0.0
    %176 = vmatprep.subr.mxu0 0.0
    %177 = vmatpush2.xpose.msra.mxu0 0.0
    %178 = vmatprep.subr.mxu0 0.0
    %179 = vmatpush2.xpose.msra.mxu0 0.0
    %180 = vmatprep.subr.mxu0 0.0
    %181 = vmatpush2.xpose.msra.mxu0 0.0
    %182 = vmatprep.subr.mxu0 0.0
    %183 = vmatpush2.xpose.msra.mxu0 0.0
    %184 = vmatprep.subr.mxu0 0.0
    %185 = vmatpush2.xpose.msra.mxu0 0.0
    %186 = vmatprep.subr.mxu0 0.0
    %187 = vmatpush2.xpose.msra.mxu0 0.0
    %188 = vmatprep.subr.mxu0 0.0
    %189 = vmatpush2.xpose.msra.mxu0 0.0
    %190 = vmatprep.subr.mxu0 0.0
    %191 = vmatpush2.xpose.msra.mxu0 0.0
    %192 = vmatprep.subr.mxu0 0.0
    %193 = vmatpush2.xpose.msra.mxu0 0.0
    %194 = vmatprep.subr.mxu0 0.0
    %195 = vmatpush2.xpose.msra.mxu0 0.0
    %196 = vmatprep.subr.mxu0 0.0
    %197 = vmatpush2.xpose.msra.mxu0 0.0
    %198 = vmatprep.mubr.f32.mxu0 0.0
    %199 = vmatmul.mubr.f32.gmra.mxu0 %v95
    %v200 = vpop.f32.mrf.mxu0
    %v201 = vadd.f32 %v132, %v200
    %v202 = vpop.f32.mrf.mxu0
    %203 = vmatprep.mubr.f32.mxu0 0.0
    %204 = vmatmul.mubr.f32.gmra.mxu0 %v96
    %v205 = vpop.f32.mrf.mxu0
    %v206 = vadd.f32 %v132, %v205
    %v207 = vpop.f32.mrf.mxu0
    %208 = vmatprep.mubr.f32.mxu0 0.0
    %209 = vmatmul.mubr.f32.gmra.mxu0 %v97
    %v210 = vpop.f32.mrf.mxu0
    %v211 = vadd.f32 %v132, %v210
    %v212 = vpop.f32.mrf.mxu0
    %213 = vmatprep.mubr.f32.mxu0 0.0
    %214 = vmatmul.mubr.f32.gmra.mxu0 %v98
    %v215 = vpop.f32.mrf.mxu0
    %v216 = vadd.f32 %v132, %v215
    %v217 = vpop.f32.mrf.mxu0
    %218 = vmatprep.mubr.f32.mxu0 0.0
    %219 = vmatmul.mubr.f32.gmra.mxu0 %v99
    %v220 = vpop.f32.mrf.mxu0
    %v221 = vadd.f32 %v132, %v220
    %v222 = vpop.f32.mrf.mxu0
    %223 = vmatprep.mubr.f32.mxu0 0.0
    %224 = vmatmul.mubr.f32.gmra.mxu0 %v100
    %v225 = vpop.f32.mrf.mxu0
    %v226 = vadd.f32 %v132, %v225
    %v227 = vpop.f32.mrf.mxu0
    %228 = vmatprep.mubr.f32.mxu0 0.0
    %229 = vmatmul.mubr.f32.gmra.mxu0 %v101
    %v230 = vpop.f32.mrf.mxu0
    %v231 = vadd.f32 %v132, %v230
    %v232 = vpop.f32.mrf.mxu0
    %233 = vmatprep.mubr.f32.mxu0 0.0
    %234 = vmatmul.mubr.f32.gmra.mxu0 %v102
    %v235 = vpop.f32.mrf.mxu0
    %v236 = vadd.f32 %v132, %v235
    %v237 = vpop.f32.mrf.mxu0
    %238 = vmatprep.mubr.f32.mxu0 0.0
    %239 = vmatmul.mubr.f32.gmra.mxu0 %v103
    %v240 = vpop.f32.mrf.mxu0
    %v241 = vadd.f32 %v132, %v240
    %v242 = vpop.f32.mrf.mxu0
    %243 = vmatprep.mubr.f32.mxu0 0.0
    %244 = vmatmul.mubr.f32.gmra.mxu0 %v104
    %v245 = vpop.f32.mrf.mxu0
    %v246 = vadd.f32 %v132, %v245
    %v247 = vpop.f32.mrf.mxu0
    %248 = vmatprep.mubr.f32.mxu0 0.0
    %249 = vmatmul.mubr.f32.gmra.mxu0 %v105
    %v250 = vpop.f32.mrf.mxu0
    %v251 = vadd.f32 %v132, %v250
    %v252 = vpop.f32.mrf.mxu0
    %253 = vmatprep.mubr.f32.mxu0 0.0
    %254 = vmatmul.mubr.f32.gmra.mxu0 %v106
    %v255 = vpop.f32.mrf.mxu0
    %v256 = vadd.f32 %v132, %v255
    %v257 = vpop.f32.mrf.mxu0
    %258 = vmatprep.mubr.f32.mxu0 0.0
    %259 = vmatmul.mubr.f32.gmra.mxu0 %v107
    %v260 = vpop.f32.mrf.mxu0
    %v261 = vadd.f32 %v132, %v260
    %v262 = vpop.f32.mrf.mxu0
    %263 = vmatprep.mubr.f32.mxu0 0.0
    %264 = vmatmul.mubr.f32.gmra.mxu0 %v108
    %v265 = vpop.f32.mrf.mxu0
    %v266 = vadd.f32 %v132, %v265
    %v267 = vpop.f32.mrf.mxu0
    %268 = vmatprep.mubr.f32.mxu0 0.0
    %269 = vmatmul.mubr.f32.gmra.mxu0 %v109
    %v270 = vpop.f32.mrf.mxu0
    %v271 = vadd.f32 %v132, %v270
    %v272 = vpop.f32.mrf.mxu0
    %273 = vmatprep.mubr.f32.mxu0 0.0
    %274 = vmatmul.mubr.f32.gmra.mxu0 %v110
    %v275 = vpop.f32.mrf.mxu0
    %v276 = vadd.f32 %v132, %v275
    %v277 = vpop.f32.mrf.mxu0
    %278 = vdwg.mxu0
    %v279 = vld [vmem:[#allocation2] sm:$0xff]
    %v280 = vld [vmem:[#allocation2 + $0x8] sm:$0xff]
    %v281 = vld [vmem:[#allocation2 + $0x10] sm:$0xff]
    %v282 = vld [vmem:[#allocation2 + $0x18] sm:$0xff]
    %v283 = vld [vmem:[#allocation2 + $0x20] sm:$0xff]
    %v284 = vld [vmem:[#allocation2 + $0x28] sm:$0xff]
    %v285 = vld [vmem:[#allocation2 + $0x30] sm:$0xff]
    %v286 = vld [vmem:[#allocation2 + $0x38] sm:$0xff]
    %v287 = vld [vmem:[#allocation2 + $0x40] sm:$0xff]
    %v288 = vld [vmem:[#allocation2 + $0x48] sm:$0xff]
    %v289 = vld [vmem:[#allocation2 + $0x50] sm:$0xff]
    %v290 = vld [vmem:[#allocation2 + $0x58] sm:$0xff]
    %v291 = vld [vmem:[#allocation2 + $0x60] sm:$0xff]
    %v292 = vld [vmem:[#allocation2 + $0x68] sm:$0xff]
    %v293 = vld [vmem:[#allocation2 + $0x70] sm:$0xff]
    %v294 = vld [vmem:[#allocation2 + $0x78] sm:$0xff]
    %295 = vmax.xlane.f32.xlu0 %v201
    %v296 = vpop.xlane.xlu0 %295
    %297 = vmax.xlane.f32.xlu0 %v206
    %v298 = vpop.xlane.xlu0 %297
    %299 = vmax.xlane.f32.xlu0 %v211
    %v300 = vpop.xlane.xlu0 %299
    %301 = vmax.xlane.f32.xlu0 %v216
    %v302 = vpop.xlane.xlu0 %301
    %303 = vmax.xlane.f32.xlu0 %v221
    %v304 = vpop.xlane.xlu0 %303
    %305 = vmax.xlane.f32.xlu0 %v226
    %v306 = vpop.xlane.xlu0 %305
    %307 = vmax.xlane.f32.xlu0 %v231
    %v308 = vpop.xlane.xlu0 %307
    %309 = vmax.xlane.f32.xlu0 %v236
    %v310 = vpop.xlane.xlu0 %309
    %311 = vmax.xlane.f32.xlu0 %v241
    %v312 = vpop.xlane.xlu0 %311
    %313 = vmax.xlane.f32.xlu0 %v246
    %v314 = vpop.xlane.xlu0 %313
    %315 = vmax.xlane.f32.xlu0 %v251
    %v316 = vpop.xlane.xlu0 %315
    %317 = vmax.xlane.f32.xlu0 %v256
    %v318 = vpop.xlane.xlu0 %317
    %319 = vmax.xlane.f32.xlu0 %v261
    %v320 = vpop.xlane.xlu0 %319
    %321 = vmax.xlane.f32.xlu0 %v266
    %v322 = vpop.xlane.xlu0 %321
    %323 = vmax.xlane.f32.xlu0 %v271
    %v324 = vpop.xlane.xlu0 %323
    %325 = vmax.xlane.f32.xlu0 %v276
    %v326 = vpop.xlane.xlu0 %325
    %v327 = vmax.f32 %v279, %v296
    %v328 = vmax.f32 %v280, %v298
    %v329 = vmax.f32 %v281, %v300
    %v330 = vmax.f32 %v282, %v302
    %v331 = vmax.f32 %v283, %v304
    %v332 = vmax.f32 %v284, %v306
    %v333 = vmax.f32 %v285, %v308
    %v334 = vmax.f32 %v286, %v310
    %v335 = vmax.f32 %v287, %v312
    %v336 = vmax.f32 %v288, %v314
    %v337 = vmax.f32 %v289, %v316
    %v338 = vmax.f32 %v290, %v318
    %v339 = vmax.f32 %v291, %v320
    %v340 = vmax.f32 %v292, %v322
    %v341 = vmax.f32 %v293, %v324
    %v342 = vmax.f32 %v294, %v326
    %v343 = vsub.f32 %v279, %v327
    %v344 = vsub.f32 %v280, %v328
    %v345 = vsub.f32 %v281, %v329
    %v346 = vsub.f32 %v282, %v330
    %v347 = vsub.f32 %v283, %v331
    %v348 = vsub.f32 %v284, %v332
    %v349 = vsub.f32 %v285, %v333
    %v350 = vsub.f32 %v286, %v334
    %v351 = vsub.f32 %v287, %v335
    %v352 = vsub.f32 %v288, %v336
    %v353 = vsub.f32 %v289, %v337
    %v354 = vsub.f32 %v290, %v338
    %v355 = vsub.f32 %v291, %v339
    %v356 = vsub.f32 %v292, %v340
    %v357 = vsub.f32 %v293, %v341
    %v358 = vsub.f32 %v294, %v342
    %v359 = vmul.f32 %v343, 1.442695
    %v360 = vpow.pop %v359
    %v361 = vmul.f32 %v344, 1.442695
    %v362 = vpow.pop %v361
    %v363 = vmul.f32 %v345, 1.442695
    %v364 = vpow.pop %v363
    %v365 = vmul.f32 %v346, 1.442695
    %v366 = vpow.pop %v365
    %v367 = vmul.f32 %v347, 1.442695
    %v368 = vpow.pop %v367
    %v369 = vmul.f32 %v348, 1.442695
    %v370 = vpow.pop %v369
    %v371 = vmul.f32 %v349, 1.442695
    %v372 = vpow.pop %v371
    %v373 = vmul.f32 %v350, 1.442695
    %v374 = vpow.pop %v373
    %v375 = vmul.f32 %v351, 1.442695
    %v376 = vpow.pop %v375
    %v377 = vmul.f32 %v352, 1.442695
    %v378 = vpow.pop %v377
    %v379 = vmul.f32 %v353, 1.442695
    %v380 = vpow.pop %v379
    %v381 = vmul.f32 %v354, 1.442695
    %v382 = vpow.pop %v381
    %v383 = vmul.f32 %v355, 1.442695
    %v384 = vpow.pop %v383
    %v385 = vmul.f32 %v356, 1.442695
    %v386 = vpow.pop %v385
    %v387 = vmul.f32 %v357, 1.442695
    %v388 = vpow.pop %v387
    %v389 = vmul.f32 %v358, 1.442695
    %v390 = vpow.pop %v389
    %v391 = vld [vmem:[#allocation3] sm:$0xff]
    %v392 = vld [vmem:[#allocation3 + $0x8] sm:$0xff]
    %v393 = vld [vmem:[#allocation3 + $0x10] sm:$0xff]
    %v394 = vld [vmem:[#allocation3 + $0x18] sm:$0xff]
    %v395 = vld [vmem:[#allocation3 + $0x20] sm:$0xff]
    %v396 = vld [vmem:[#allocation3 + $0x28] sm:$0xff]
    %v397 = vld [vmem:[#allocation3 + $0x30] sm:$0xff]
    %v398 = vld [vmem:[#allocation3 + $0x38] sm:$0xff]
    %v399 = vld [vmem:[#allocation3 + $0x40] sm:$0xff]
    %v400 = vld [vmem:[#allocation3 + $0x48] sm:$0xff]
    %v401 = vld [vmem:[#allocation3 + $0x50] sm:$0xff]
    %v402 = vld [vmem:[#allocation3 + $0x58] sm:$0xff]
    %v403 = vld [vmem:[#allocation3 + $0x60] sm:$0xff]
    %v404 = vld [vmem:[#allocation3 + $0x68] sm:$0xff]
    %v405 = vld [vmem:[#allocation3 + $0x70] sm:$0xff]
    %v406 = vld [vmem:[#allocation3 + $0x78] sm:$0xff]
    %v407 = vmul.f32 %v360, %v391
    %v408 = vmul.f32 %v362, %v392
    %v409 = vmul.f32 %v364, %v393
    %v410 = vmul.f32 %v366, %v394
    %v411 = vmul.f32 %v368, %v395
    %v412 = vmul.f32 %v370, %v396
    %v413 = vmul.f32 %v372, %v397
    %v414 = vmul.f32 %v374, %v398
    %v415 = vmul.f32 %v376, %v399
    %v416 = vmul.f32 %v378, %v400
    %v417 = vmul.f32 %v380, %v401
    %v418 = vmul.f32 %v382, %v402
    %v419 = vmul.f32 %v384, %v403
    %v420 = vmul.f32 %v386, %v404
    %v421 = vmul.f32 %v388, %v405
    %v422 = vmul.f32 %v390, %v406
    %424 = vset.pattern.permute.xlu0 0
    %425 = vperm.xlu0 %424, %v327
    %v426 = vpop.permute.xlu0 %425
    %429 = vset.pattern.permute.xlu0 0
    %430 = vperm.xlu0 %429, %v328
    %v431 = vpop.permute.xlu0 %430
    %434 = vset.pattern.permute.xlu0 0
    %435 = vperm.xlu0 %434, %v329
    %v436 = vpop.permute.xlu0 %435
    %439 = vset.pattern.permute.xlu0 0
    %440 = vperm.xlu0 %439, %v330
    %v441 = vpop.permute.xlu0 %440
    %444 = vset.pattern.permute.xlu0 0
    %445 = vperm.xlu0 %444, %v331
    %v446 = vpop.permute.xlu0 %445
    %449 = vset.pattern.permute.xlu0 0
    %450 = vperm.xlu0 %449, %v332
    %v451 = vpop.permute.xlu0 %450
    %454 = vset.pattern.permute.xlu0 0
    %455 = vperm.xlu0 %454, %v333
    %v456 = vpop.permute.xlu0 %455
    %459 = vset.pattern.permute.xlu0 0
    %460 = vperm.xlu0 %459, %v334
    %v461 = vpop.permute.xlu0 %460
    %464 = vset.pattern.permute.xlu0 0
    %465 = vperm.xlu0 %464, %v335
    %v466 = vpop.permute.xlu0 %465
    %469 = vset.pattern.permute.xlu0 0
    %470 = vperm.xlu0 %469, %v336
    %v471 = vpop.permute.xlu0 %470
    %474 = vset.pattern.permute.xlu0 0
    %475 = vperm.xlu0 %474, %v337
    %v476 = vpop.permute.xlu0 %475
    %479 = vset.pattern.permute.xlu0 0
    %480 = vperm.xlu0 %479, %v338
    %v481 = vpop.permute.xlu0 %480
    %484 = vset.pattern.permute.xlu0 0
    %485 = vperm.xlu0 %484, %v339
    %v486 = vpop.permute.xlu0 %485
    %489 = vset.pattern.permute.xlu0 0
    %490 = vperm.xlu0 %489, %v340
    %v491 = vpop.permute.xlu0 %490
    %494 = vset.pattern.permute.xlu0 0
    %495 = vperm.xlu0 %494, %v341
    %v496 = vpop.permute.xlu0 %495
    %499 = vset.pattern.permute.xlu0 0
    %500 = vperm.xlu0 %499, %v342
    %v501 = vpop.permute.xlu0 %500
    %v503 = vsub.f32 %v201, %v426
    %v504 = vsub.f32 %v206, %v431
    %v505 = vsub.f32 %v211, %v436
    %v506 = vsub.f32 %v216, %v441
    %v507 = vsub.f32 %v221, %v446
    %v508 = vsub.f32 %v226, %v451
    %v509 = vsub.f32 %v231, %v456
    %v510 = vsub.f32 %v236, %v461
    %v511 = vsub.f32 %v241, %v466
    %v512 = vsub.f32 %v246, %v471
    %v513 = vsub.f32 %v251, %v476
    %v514 = vsub.f32 %v256, %v481
    %v515 = vsub.f32 %v261, %v486
    %v516 = vsub.f32 %v266, %v491
    %v517 = vsub.f32 %v271, %v496
    %v518 = vsub.f32 %v276, %v501
    %v519 = vmul.f32 %v503, 1.442695
    %v520 = vpow.pop %v519
    %v521 = vmul.f32 %v504, 1.442695
    %v522 = vpow.pop %v521
    %v523 = vmul.f32 %v505, 1.442695
    %v524 = vpow.pop %v523
    %v525 = vmul.f32 %v506, 1.442695
    %v526 = vpow.pop %v525
    %v527 = vmul.f32 %v507, 1.442695
    %v528 = vpow.pop %v527
    %v529 = vmul.f32 %v508, 1.442695
    %v530 = vpow.pop %v529
    %v531 = vmul.f32 %v509, 1.442695
    %v532 = vpow.pop %v531
    %v533 = vmul.f32 %v510, 1.442695
    %v534 = vpow.pop %v533
    %v535 = vmul.f32 %v511, 1.442695
    %v536 = vpow.pop %v535
    %v537 = vmul.f32 %v512, 1.442695
    %v538 = vpow.pop %v537
    %v539 = vmul.f32 %v513, 1.442695
    %v540 = vpow.pop %v539
    %v541 = vmul.f32 %v514, 1.442695
    %v542 = vpow.pop %v541
    %v543 = vmul.f32 %v515, 1.442695
    %v544 = vpow.pop %v543
    %v545 = vmul.f32 %v516, 1.442695
    %v546 = vpow.pop %v545
    %v547 = vmul.f32 %v517, 1.442695
    %v548 = vpow.pop %v547
    %v549 = vmul.f32 %v518, 1.442695
    %v550 = vpow.pop %v549
    %551 = vadd.xlane.f32.xlu0 %v520
    %v552 = vpop.xlane.xlu0 %551
    %553 = vadd.xlane.f32.xlu0 %v522
    %v554 = vpop.xlane.xlu0 %553
    %555 = vadd.xlane.f32.xlu0 %v524
    %v556 = vpop.xlane.xlu0 %555
    %557 = vadd.xlane.f32.xlu0 %v526
    %v558 = vpop.xlane.xlu0 %557
    %559 = vadd.xlane.f32.xlu0 %v528
    %v560 = vpop.xlane.xlu0 %559
    %561 = vadd.xlane.f32.xlu0 %v530
    %v562 = vpop.xlane.xlu0 %561
    %563 = vadd.xlane.f32.xlu0 %v532
    %v564 = vpop.xlane.xlu0 %563
    %565 = vadd.xlane.f32.xlu0 %v534
    %v566 = vpop.xlane.xlu0 %565
    %567 = vadd.xlane.f32.xlu0 %v536
    %v568 = vpop.xlane.xlu0 %567
    %569 = vadd.xlane.f32.xlu0 %v538
    %v570 = vpop.xlane.xlu0 %569
    %571 = vadd.xlane.f32.xlu0 %v540
    %v572 = vpop.xlane.xlu0 %571
    %573 = vadd.xlane.f32.xlu0 %v542
    %v574 = vpop.xlane.xlu0 %573
    %575 = vadd.xlane.f32.xlu0 %v544
    %v576 = vpop.xlane.xlu0 %575
    %577 = vadd.xlane.f32.xlu0 %v546
    %v578 = vpop.xlane.xlu0 %577
    %579 = vadd.xlane.f32.xlu0 %v548
    %v580 = vpop.xlane.xlu0 %579
    %581 = vadd.xlane.f32.xlu0 %v550
    %v582 = vpop.xlane.xlu0 %581
    %v583 = vadd.f32 %v407, %v552
    %v584 = vadd.f32 %v408, %v554
    %v585 = vadd.f32 %v409, %v556
    %v586 = vadd.f32 %v410, %v558
    %v587 = vadd.f32 %v411, %v560
    %v588 = vadd.f32 %v412, %v562
    %v589 = vadd.f32 %v413, %v564
    %v590 = vadd.f32 %v414, %v566
    %v591 = vadd.f32 %v415, %v568
    %v592 = vadd.f32 %v416, %v570
    %v593 = vadd.f32 %v417, %v572
    %v594 = vadd.f32 %v418, %v574
    %v595 = vadd.f32 %v419, %v576
    %v596 = vadd.f32 %v420, %v578
    %v597 = vadd.f32 %v421, %v580
    %v598 = vadd.f32 %v422, %v582
    %vm599 = vcmask 7168
    %600 = vst.msk [vmem:[#allocation3] sm:$0xff] %vm599, %v583
    %601 = vst.msk [vmem:[#allocation3 + $0x8] sm:$0xff] %vm599, %v584
    %602 = vst.msk [vmem:[#allocation3 + $0x10] sm:$0xff] %vm599, %v585
    %603 = vst.msk [vmem:[#allocation3 + $0x18] sm:$0xff] %vm599, %v586
    %604 = vst.msk [vmem:[#allocation3 + $0x20] sm:$0xff] %vm599, %v587
    %605 = vst.msk [vmem:[#allocation3 + $0x28] sm:$0xff] %vm599, %v588
    %606 = vst.msk [vmem:[#allocation3 + $0x30] sm:$0xff] %vm599, %v589
    %607 = vst.msk [vmem:[#allocation3 + $0x38] sm:$0xff] %vm599, %v590
    %608 = vst.msk [vmem:[#allocation3 + $0x40] sm:$0xff] %vm599, %v591
    %609 = vst.msk [vmem:[#allocation3 + $0x48] sm:$0xff] %vm599, %v592
    %610 = vst.msk [vmem:[#allocation3 + $0x50] sm:$0xff] %vm599, %v593
    %611 = vst.msk [vmem:[#allocation3 + $0x58] sm:$0xff] %vm599, %v594
    %612 = vst.msk [vmem:[#allocation3 + $0x60] sm:$0xff] %vm599, %v595
    %613 = vst.msk [vmem:[#allocation3 + $0x68] sm:$0xff] %vm599, %v596
    %614 = vst.msk [vmem:[#allocation3 + $0x70] sm:$0xff] %vm599, %v597
    %615 = vst.msk [vmem:[#allocation3 + $0x78] sm:$0xff] %vm599, %v598
    %616 = vst.msk [vmem:[#allocation2] sm:$0xff] %vm599, %v327
    %617 = vst.msk [vmem:[#allocation2 + $0x8] sm:$0xff] %vm599, %v328
    %618 = vst.msk [vmem:[#allocation2 + $0x10] sm:$0xff] %vm599, %v329
    %619 = vst.msk [vmem:[#allocation2 + $0x18] sm:$0xff] %vm599, %v330
    %620 = vst.msk [vmem:[#allocation2 + $0x20] sm:$0xff] %vm599, %v331
    %621 = vst.msk [vmem:[#allocation2 + $0x28] sm:$0xff] %vm599, %v332
    %622 = vst.msk [vmem:[#allocation2 + $0x30] sm:$0xff] %vm599, %v333
    %623 = vst.msk [vmem:[#allocation2 + $0x38] sm:$0xff] %vm599, %v334
    %624 = vst.msk [vmem:[#allocation2 + $0x40] sm:$0xff] %vm599, %v335
    %625 = vst.msk [vmem:[#allocation2 + $0x48] sm:$0xff] %vm599, %v336
    %626 = vst.msk [vmem:[#allocation2 + $0x50] sm:$0xff] %vm599, %v337
    %627 = vst.msk [vmem:[#allocation2 + $0x58] sm:$0xff] %vm599, %v338
    %628 = vst.msk [vmem:[#allocation2 + $0x60] sm:$0xff] %vm599, %v339
    %629 = vst.msk [vmem:[#allocation2 + $0x68] sm:$0xff] %vm599, %v340
    %630 = vst.msk [vmem:[#allocation2 + $0x70] sm:$0xff] %vm599, %v341
    %631 = vst.msk [vmem:[#allocation2 + $0x78] sm:$0xff] %vm599, %v342
    %p632 = scmp.eq.s32.totalorder 0, 0
    // Predicated region
    $region26: #{tpu_custom_call.1} parent=1 // pred_check
      %p633 = pneg %p632
    $region27: #{tpu_custom_call.1} parent=1 // pred_check_branch
      %635 = sbr.rel (%p633) target = $region29
    $region28: #{tpu_custom_call.1} parent=1 // pred_region
      %v636 = vmul.f32 %v95, %v111
      %v637 = vmul.f32 %v96, %v112
      %v638 = vmul.f32 %v97, %v113
      %v639 = vmul.f32 %v98, %v114
      %v640 = vmul.f32 %v99, %v115
      %v641 = vmul.f32 %v100, %v116
      %v642 = vmul.f32 %v101, %v117
      %v643 = vmul.f32 %v102, %v118
      %v644 = vmul.f32 %v103, %v119
      %v645 = vmul.f32 %v104, %v120
      %v646 = vmul.f32 %v105, %v121
      %v647 = vmul.f32 %v106, %v122
      %v648 = vmul.f32 %v107, %v123
      %v649 = vmul.f32 %v108, %v124
      %v650 = vmul.f32 %v109, %v125
      %v651 = vmul.f32 %v110, %v126
      %652 = vadd.xlane.f32.xlu0 %v636
      %v653 = vpop.xlane.xlu0 %652
      %654 = vadd.xlane.f32.xlu0 %v637
      %v655 = vpop.xlane.xlu0 %654
      %656 = vadd.xlane.f32.xlu0 %v638
      %v657 = vpop.xlane.xlu0 %656
      %658 = vadd.xlane.f32.xlu0 %v639
      %v659 = vpop.xlane.xlu0 %658
      %660 = vadd.xlane.f32.xlu0 %v640
      %v661 = vpop.xlane.xlu0 %660
      %662 = vadd.xlane.f32.xlu0 %v641
      %v663 = vpop.xlane.xlu0 %662
      %664 = vadd.xlane.f32.xlu0 %v642
      %v665 = vpop.xlane.xlu0 %664
      %666 = vadd.xlane.f32.xlu0 %v643
      %v667 = vpop.xlane.xlu0 %666
      %668 = vadd.xlane.f32.xlu0 %v644
      %v669 = vpop.xlane.xlu0 %668
      %670 = vadd.xlane.f32.xlu0 %v645
      %v671 = vpop.xlane.xlu0 %670
      %672 = vadd.xlane.f32.xlu0 %v646
      %v673 = vpop.xlane.xlu0 %672
      %674 = vadd.xlane.f32.xlu0 %v647
      %v675 = vpop.xlane.xlu0 %674
      %676 = vadd.xlane.f32.xlu0 %v648
      %v677 = vpop.xlane.xlu0 %676
      %678 = vadd.xlane.f32.xlu0 %v649
      %v679 = vpop.xlane.xlu0 %678
      %680 = vadd.xlane.f32.xlu0 %v650
      %v681 = vpop.xlane.xlu0 %680
      %682 = vadd.xlane.f32.xlu0 %v651
      %v683 = vpop.xlane.xlu0 %682
      %v684 = vmul.f32 %v95, %v95
      %v685 = vmul.f32 %v96, %v96
      %v686 = vmul.f32 %v97, %v97
      %v687 = vmul.f32 %v98, %v98
      %v688 = vmul.f32 %v99, %v99
      %v689 = vmul.f32 %v100, %v100
      %v690 = vmul.f32 %v101, %v101
      %v691 = vmul.f32 %v102, %v102
      %v692 = vmul.f32 %v103, %v103
      %v693 = vmul.f32 %v104, %v104
      %v694 = vmul.f32 %v105, %v105
      %v695 = vmul.f32 %v106, %v106
      %v696 = vmul.f32 %v107, %v107
      %v697 = vmul.f32 %v108, %v108
      %v698 = vmul.f32 %v109, %v109
      %v699 = vmul.f32 %v110, %v110
      %700 = vadd.xlane.f32.xlu0 %v684
      %v701 = vpop.xlane.xlu0 %700
      %702 = vadd.xlane.f32.xlu0 %v685
      %v703 = vpop.xlane.xlu0 %702
      %704 = vadd.xlane.f32.xlu0 %v686
      %v705 = vpop.xlane.xlu0 %704
      %706 = vadd.xlane.f32.xlu0 %v687
      %v707 = vpop.xlane.xlu0 %706
      %708 = vadd.xlane.f32.xlu0 %v688
      %v709 = vpop.xlane.xlu0 %708
      %710 = vadd.xlane.f32.xlu0 %v689
      %v711 = vpop.xlane.xlu0 %710
      %712 = vadd.xlane.f32.xlu0 %v690
      %v713 = vpop.xlane.xlu0 %712
      %714 = vadd.xlane.f32.xlu0 %v691
      %v715 = vpop.xlane.xlu0 %714
      %716 = vadd.xlane.f32.xlu0 %v692
      %v717 = vpop.xlane.xlu0 %716
      %718 = vadd.xlane.f32.xlu0 %v693
      %v719 = vpop.xlane.xlu0 %718
      %720 = vadd.xlane.f32.xlu0 %v694
      %v721 = vpop.xlane.xlu0 %720
      %722 = vadd.xlane.f32.xlu0 %v695
      %v723 = vpop.xlane.xlu0 %722
      %724 = vadd.xlane.f32.xlu0 %v696
      %v725 = vpop.xlane.xlu0 %724
      %726 = vadd.xlane.f32.xlu0 %v697
      %v727 = vpop.xlane.xlu0 %726
      %728 = vadd.xlane.f32.xlu0 %v698
      %v729 = vpop.xlane.xlu0 %728
      %730 = vadd.xlane.f32.xlu0 %v699
      %v731 = vpop.xlane.xlu0 %730
      %v732 = vmul.f32 %v111, %v111
      %v733 = vmul.f32 %v112, %v112
      %v734 = vmul.f32 %v113, %v113
      %v735 = vmul.f32 %v114, %v114
      %v736 = vmul.f32 %v115, %v115
      %v737 = vmul.f32 %v116, %v116
      %v738 = vmul.f32 %v117, %v117
      %v739 = vmul.f32 %v118, %v118
      %v740 = vmul.f32 %v119, %v119
      %v741 = vmul.f32 %v120, %v120
      %v742 = vmul.f32 %v121, %v121
      %v743 = vmul.f32 %v122, %v122
      %v744 = vmul.f32 %v123, %v123
      %v745 = vmul.f32 %v124, %v124
      %v746 = vmul.f32 %v125, %v125
      %v747 = vmul.f32 %v126, %v126
      %748 = vadd.xlane.f32.xlu0 %v732
      %v749 = vpop.xlane.xlu0 %748
      %750 = vadd.xlane.f32.xlu0 %v733
      %v751 = vpop.xlane.xlu0 %750
      %752 = vadd.xlane.f32.xlu0 %v734
      %v753 = vpop.xlane.xlu0 %752
      %754 = vadd.xlane.f32.xlu0 %v735
      %v755 = vpop.xlane.xlu0 %754
      %756 = vadd.xlane.f32.xlu0 %v736
      %v757 = vpop.xlane.xlu0 %756
      %758 = vadd.xlane.f32.xlu0 %v737
      %v759 = vpop.xlane.xlu0 %758
      %760 = vadd.xlane.f32.xlu0 %v738
      %v761 = vpop.xlane.xlu0 %760
      %762 = vadd.xlane.f32.xlu0 %v739
      %v763 = vpop.xlane.xlu0 %762
      %764 = vadd.xlane.f32.xlu0 %v740
      %v765 = vpop.xlane.xlu0 %764
      %766 = vadd.xlane.f32.xlu0 %v741
      %v767 = vpop.xlane.xlu0 %766
      %768 = vadd.xlane.f32.xlu0 %v742
      %v769 = vpop.xlane.xlu0 %768
      %770 = vadd.xlane.f32.xlu0 %v743
      %v771 = vpop.xlane.xlu0 %770
      %772 = vadd.xlane.f32.xlu0 %v744
      %v773 = vpop.xlane.xlu0 %772
      %774 = vadd.xlane.f32.xlu0 %v745
      %v775 = vpop.xlane.xlu0 %774
      %776 = vadd.xlane.f32.xlu0 %v746
      %v777 = vpop.xlane.xlu0 %776
      %778 = vadd.xlane.f32.xlu0 %v747
      %v779 = vpop.xlane.xlu0 %778
      %v780 = vadd.f32 %v701, %v749
      %v781 = vadd.f32 %v703, %v751
      %v782 = vadd.f32 %v705, %v753
      %v783 = vadd.f32 %v707, %v755
      %v784 = vadd.f32 %v709, %v757
      %v785 = vadd.f32 %v711, %v759
      %v786 = vadd.f32 %v713, %v761
      %v787 = vadd.f32 %v715, %v763
      %v788 = vadd.f32 %v717, %v765
      %v789 = vadd.f32 %v719, %v767
      %v790 = vadd.f32 %v721, %v769
      %v791 = vadd.f32 %v723, %v771
      %v792 = vadd.f32 %v725, %v773
      %v793 = vadd.f32 %v727, %v775
      %v794 = vadd.f32 %v729, %v777
      %v795 = vadd.f32 %v731, %v779
      %v796 = vmul.f32 %v780, 0.0005
      %v797 = vmul.f32 %v781, 0.0005
      %v798 = vmul.f32 %v782, 0.0005
      %v799 = vmul.f32 %v783, 0.0005
      %v800 = vmul.f32 %v784, 0.0005
      %v801 = vmul.f32 %v785, 0.0005
      %v802 = vmul.f32 %v786, 0.0005
      %v803 = vmul.f32 %v787, 0.0005
      %v804 = vmul.f32 %v788, 0.0005
      %v805 = vmul.f32 %v789, 0.0005
      %v806 = vmul.f32 %v790, 0.0005
      %v807 = vmul.f32 %v791, 0.0005
      %v808 = vmul.f32 %v792, 0.0005
      %v809 = vmul.f32 %v793, 0.0005
      %v810 = vmul.f32 %v794, 0.0005
      %v811 = vmul.f32 %v795, 0.0005
      %v812 = vsub.f32 %v796, %v653
      %v813 = vsub.f32 %v797, %v655
      %v814 = vsub.f32 %v798, %v657
      %v815 = vsub.f32 %v799, %v659
      %v816 = vsub.f32 %v800, %v661
      %v817 = vsub.f32 %v801, %v663
      %v818 = vsub.f32 %v802, %v665
      %v819 = vsub.f32 %v803, %v667
      %v820 = vsub.f32 %v804, %v669
      %v821 = vsub.f32 %v805, %v671
      %v822 = vsub.f32 %v806, %v673
      %v823 = vsub.f32 %v807, %v675
      %v824 = vsub.f32 %v808, %v677
      %v825 = vsub.f32 %v809, %v679
      %v826 = vsub.f32 %v810, %v681
      %v827 = vsub.f32 %v811, %v683
      %828 = vst.msk [vmem:[#allocation4] sm:$0xff] %vm599, %v812
      %829 = vst.msk [vmem:[#allocation4 + $0x8] sm:$0xff] %vm599, %v813
      %830 = vst.msk [vmem:[#allocation4 + $0x10] sm:$0xff] %vm599, %v814
      %831 = vst.msk [vmem:[#allocation4 + $0x18] sm:$0xff] %vm599, %v815
      %832 = vst.msk [vmem:[#allocation4 + $0x20] sm:$0xff] %vm599, %v816
      %833 = vst.msk [vmem:[#allocation4 + $0x28] sm:$0xff] %vm599, %v817
      %834 = vst.msk [vmem:[#allocation4 + $0x30] sm:$0xff] %vm599, %v818
      %835 = vst.msk [vmem:[#allocation4 + $0x38] sm:$0xff] %vm599, %v819
      %836 = vst.msk [vmem:[#allocation4 + $0x40] sm:$0xff] %vm599, %v820
      %837 = vst.msk [vmem:[#allocation4 + $0x48] sm:$0xff] %vm599, %v821
      %838 = vst.msk [vmem:[#allocation4 + $0x50] sm:$0xff] %vm599, %v822
      %839 = vst.msk [vmem:[#allocation4 + $0x58] sm:$0xff] %vm599, %v823
      %840 = vst.msk [vmem:[#allocation4 + $0x60] sm:$0xff] %vm599, %v824
      %841 = vst.msk [vmem:[#allocation4 + $0x68] sm:$0xff] %vm599, %v825
      %842 = vst.msk [vmem:[#allocation4 + $0x70] sm:$0xff] %vm599, %v826
      %843 = vst.msk [vmem:[#allocation4 + $0x78] sm:$0xff] %vm599, %v827
    $region29: #{tpu_custom_call.1} parent=1 // pred_fallthru
      _
    // Predicated region
    $region30: #{tpu_custom_call.1} parent=1 // pred_check
      %p844 = pneg %p42
    $region31: #{tpu_custom_call.1} parent=1 // pred_check_branch
      %846 = sbr.rel (%p844) target = $region33
    $region32: #{tpu_custom_call.1} parent=1 // pred_region
      %v847 = vld [vmem:[#allocation2] sm:$0xff]
      %v848 = vld [vmem:[#allocation2 + $0x8] sm:$0xff]
      %v849 = vld [vmem:[#allocation2 + $0x10] sm:$0xff]
      %v850 = vld [vmem:[#allocation2 + $0x18] sm:$0xff]
      %v851 = vld [vmem:[#allocation2 + $0x20] sm:$0xff]
      %v852 = vld [vmem:[#allocation2 + $0x28] sm:$0xff]
      %v853 = vld [vmem:[#allocation2 + $0x30] sm:$0xff]
      %v854 = vld [vmem:[#allocation2 + $0x38] sm:$0xff]
      %v855 = vld [vmem:[#allocation2 + $0x40] sm:$0xff]
      %v856 = vld [vmem:[#allocation2 + $0x48] sm:$0xff]
      %v857 = vld [vmem:[#allocation2 + $0x50] sm:$0xff]
      %v858 = vld [vmem:[#allocation2 + $0x58] sm:$0xff]
      %v859 = vld [vmem:[#allocation2 + $0x60] sm:$0xff]
      %v860 = vld [vmem:[#allocation2 + $0x68] sm:$0xff]
      %v861 = vld [vmem:[#allocation2 + $0x70] sm:$0xff]
      %v862 = vld [vmem:[#allocation2 + $0x78] sm:$0xff]
      %v863 = vld [vmem:[#allocation3] sm:$0xff]
      %v864 = vld [vmem:[#allocation3 + $0x8] sm:$0xff]
      %v865 = vld [vmem:[#allocation3 + $0x10] sm:$0xff]
      %v866 = vld [vmem:[#allocation3 + $0x18] sm:$0xff]
      %v867 = vld [vmem:[#allocation3 + $0x20] sm:$0xff]
      %v868 = vld [vmem:[#allocation3 + $0x28] sm:$0xff]
      %v869 = vld [vmem:[#allocation3 + $0x30] sm:$0xff]
      %v870 = vld [vmem:[#allocation3 + $0x38] sm:$0xff]
      %v871 = vld [vmem:[#allocation3 + $0x40] sm:$0xff]
      %v872 = vld [vmem:[#allocation3 + $0x48] sm:$0xff]
      %v873 = vld [vmem:[#allocation3 + $0x50] sm:$0xff]
      %v874 = vld [vmem:[#allocation3 + $0x58] sm:$0xff]
      %v875 = vld [vmem:[#allocation3 + $0x60] sm:$0xff]
      %v876 = vld [vmem:[#allocation3 + $0x68] sm:$0xff]
      %v877 = vld [vmem:[#allocation3 + $0x70] sm:$0xff]
      %v878 = vld [vmem:[#allocation3 + $0x78] sm:$0xff]
      %v879 = vlog2.pop %v863
      %v880 = vmul.f32 %v879, 0.6931472
      %v881 = vlog2.pop %v864
      %v882 = vmul.f32 %v881, 0.6931472
      %v883 = vlog2.pop %v865
      %v884 = vmul.f32 %v883, 0.6931472
      %v885 = vlog2.pop %v866
      %v886 = vmul.f32 %v885, 0.6931472
      %v887 = vlog2.pop %v867
      %v888 = vmul.f32 %v887, 0.6931472
      %v889 = vlog2.pop %v868
      %v890 = vmul.f32 %v889, 0.6931472
      %v891 = vlog2.pop %v869
      %v892 = vmul.f32 %v891, 0.6931472
      %v893 = vlog2.pop %v870
      %v894 = vmul.f32 %v893, 0.6931472
      %v895 = vlog2.pop %v871
      %v896 = vmul.f32 %v895, 0.6931472
      %v897 = vlog2.pop %v872
      %v898 = vmul.f32 %v897, 0.6931472
      %v899 = vlog2.pop %v873
      %v900 = vmul.f32 %v899, 0.6931472
      %v901 = vlog2.pop %v874
      %v902 = vmul.f32 %v901, 0.6931472
      %v903 = vlog2.pop %v875
      %v904 = vmul.f32 %v903, 0.6931472
      %v905 = vlog2.pop %v876
      %v906 = vmul.f32 %v905, 0.6931472
      %v907 = vlog2.pop %v877
      %v908 = vmul.f32 %v907, 0.6931472
      %v909 = vlog2.pop %v878
      %v910 = vmul.f32 %v909, 0.6931472
      %v911 = vadd.f32 %v847, %v880
      %v912 = vadd.f32 %v848, %v882
      %v913 = vadd.f32 %v849, %v884
      %v914 = vadd.f32 %v850, %v886
      %v915 = vadd.f32 %v851, %v888
      %v916 = vadd.f32 %v852, %v890
      %v917 = vadd.f32 %v853, %v892
      %v918 = vadd.f32 %v854, %v894
      %v919 = vadd.f32 %v855, %v896
      %v920 = vadd.f32 %v856, %v898
      %v921 = vadd.f32 %v857, %v900
      %v922 = vadd.f32 %v858, %v902
      %v923 = vadd.f32 %v859, %v904
      %v924 = vadd.f32 %v860, %v906
      %v925 = vadd.f32 %v861, %v908
      %v926 = vadd.f32 %v862, %v910
      %v927 = vld [vmem:[#allocation4] sm:$0xff]
      %v928 = vld [vmem:[#allocation4 + $0x8] sm:$0xff]
      %v929 = vld [vmem:[#allocation4 + $0x10] sm:$0xff]
      %v930 = vld [vmem:[#allocation4 + $0x18] sm:$0xff]
      %v931 = vld [vmem:[#allocation4 + $0x20] sm:$0xff]
      %v932 = vld [vmem:[#allocation4 + $0x28] sm:$0xff]
      %v933 = vld [vmem:[#allocation4 + $0x30] sm:$0xff]
      %v934 = vld [vmem:[#allocation4 + $0x38] sm:$0xff]
      %v935 = vld [vmem:[#allocation4 + $0x40] sm:$0xff]
      %v936 = vld [vmem:[#allocation4 + $0x48] sm:$0xff]
      %v937 = vld [vmem:[#allocation4 + $0x50] sm:$0xff]
      %v938 = vld [vmem:[#allocation4 + $0x58] sm:$0xff]
      %v939 = vld [vmem:[#allocation4 + $0x60] sm:$0xff]
      %v940 = vld [vmem:[#allocation4 + $0x68] sm:$0xff]
      %v941 = vld [vmem:[#allocation4 + $0x70] sm:$0xff]
      %v942 = vld [vmem:[#allocation4 + $0x78] sm:$0xff]
      %v943 = vadd.f32 %v911, %v927
      %v944 = vadd.f32 %v912, %v928
      %v945 = vadd.f32 %v913, %v929
      %v946 = vadd.f32 %v914, %v930
      %v947 = vadd.f32 %v915, %v931
      %v948 = vadd.f32 %v916, %v932
      %v949 = vadd.f32 %v917, %v933
      %v950 = vadd.f32 %v918, %v934
      %v951 = vadd.f32 %v919, %v935
      %v952 = vadd.f32 %v920, %v936
      %v953 = vadd.f32 %v921, %v937
      %v954 = vadd.f32 %v922, %v938
      %v955 = vadd.f32 %v923, %v939
      %v956 = vadd.f32 %v924, %v940
      %v957 = vadd.f32 %v925, %v941
      %v958 = vadd.f32 %v926, %v942
      %v959 = vlaneseq
      %v960 = vshrl.u32 %v959, 7
      %v961 = vadd.s32 %v960, 8
      %v962 = vadd.s32 %v960, 16
      %v963 = vadd.s32 %v960, 24
      %v964 = vadd.s32 %v960, 32
      %v965 = vadd.s32 %v960, 40
      %v966 = vadd.s32 %v960, 48
      %v967 = vadd.s32 %v960, 56
      %v968 = vadd.s32 %v960, 64
      %v969 = vadd.s32 %v960, 72
      %v970 = vadd.s32 %v960, 80
      %v971 = vadd.s32 %v960, 88
      %v972 = vadd.s32 %v960, 96
      %v973 = vadd.s32 %v960, 104
      %v974 = vadd.s32 %v960, 112
      %v975 = vadd.s32 %v960, 120
      %s976 = smul.u32 0, 128
      %v977 = vstv %s976
      %v978 = vadd.s32 %v960, %v977
      %v979 = vadd.s32 %v961, %v977
      %v980 = vadd.s32 %v962, %v977
      %v981 = vadd.s32 %v963, %v977
      %v982 = vadd.s32 %v964, %v977
      %v983 = vadd.s32 %v965, %v977
      %v984 = vadd.s32 %v966, %v977
      %v985 = vadd.s32 %v967, %v977
      %v986 = vadd.s32 %v968, %v977
      %v987 = vadd.s32 %v969, %v977
      %v988 = vadd.s32 %v970, %v977
      %v989 = vadd.s32 %v971, %v977
      %v990 = vadd.s32 %v972, %v977
      %v991 = vadd.s32 %v973, %v977
      %v992 = vadd.s32 %v974, %v977
      %v993 = vadd.s32 %v975, %v977
      %vm994 = vcmp.lt.s32.totalorder %v978, 8
      %vm995 = vcmp.lt.s32.totalorder %v979, 8
      %vm996 = vcmp.lt.s32.totalorder %v980, 8
      %vm997 = vcmp.lt.s32.totalorder %v981, 8
      %vm998 = vcmp.lt.s32.totalorder %v982, 8
      %vm999 = vcmp.lt.s32.totalorder %v983, 8
      %vm1000 = vcmp.lt.s32.totalorder %v984, 8
      %vm1001 = vcmp.lt.s32.totalorder %v985, 8
      %vm1002 = vcmp.lt.s32.totalorder %v986, 8
      %vm1003 = vcmp.lt.s32.totalorder %v987, 8
      %vm1004 = vcmp.lt.s32.totalorder %v988, 8
      %vm1005 = vcmp.lt.s32.totalorder %v989, 8
      %vm1006 = vcmp.lt.s32.totalorder %v990, 8
      %vm1007 = vcmp.lt.s32.totalorder %v991, 8
      %vm1008 = vcmp.lt.s32.totalorder %v992, 8
      %vm1009 = vcmp.lt.s32.totalorder %v993, 8
      %v1010 = vsel %vm994, %v943, 0.0
      %v1011 = vsel %vm995, %v944, 0.0
      %v1012 = vsel %vm996, %v945, 0.0
      %v1013 = vsel %vm997, %v946, 0.0
      %v1014 = vsel %vm998, %v947, 0.0
      %v1015 = vsel %vm999, %v948, 0.0
      %v1016 = vsel %vm1000, %v949, 0.0
      %v1017 = vsel %vm1001, %v950, 0.0
      %v1018 = vsel %vm1002, %v951, 0.0
      %v1019 = vsel %vm1003, %v952, 0.0
      %v1020 = vsel %vm1004, %v953, 0.0
      %v1021 = vsel %vm1005, %v954, 0.0
      %v1022 = vsel %vm1006, %v955, 0.0
      %v1023 = vsel %vm1007, %v956, 0.0
      %v1024 = vsel %vm1008, %v957, 0.0
      %v1025 = vsel %vm1009, %v958, 0.0
      %1026 = vst.msk [vmem:[%s3] sm:$0xff] %vm599, %v1010
      %1027 = vst.msk [vmem:[%s3 + $0x8] sm:$0xff] %vm599, %v1011
      %1028 = vst.msk [vmem:[%s3 + $0x10] sm:$0xff] %vm599, %v1012
      %1029 = vst.msk [vmem:[%s3 + $0x18] sm:$0xff] %vm599, %v1013
      %1030 = vst.msk [vmem:[%s3 + $0x20] sm:$0xff] %vm599, %v1014
      %1031 = vst.msk [vmem:[%s3 + $0x28] sm:$0xff] %vm599, %v1015
      %1032 = vst.msk [vmem:[%s3 + $0x30] sm:$0xff] %vm599, %v1016
      %1033 = vst.msk [vmem:[%s3 + $0x38] sm:$0xff] %vm599, %v1017
      %1034 = vst.msk [vmem:[%s3 + $0x40] sm:$0xff] %vm599, %v1018
      %1035 = vst.msk [vmem:[%s3 + $0x48] sm:$0xff] %vm599, %v1019
      %1036 = vst.msk [vmem:[%s3 + $0x50] sm:$0xff] %vm599, %v1020
      %1037 = vst.msk [vmem:[%s3 + $0x58] sm:$0xff] %vm599, %v1021
      %1038 = vst.msk [vmem:[%s3 + $0x60] sm:$0xff] %vm599, %v1022
      %1039 = vst.msk [vmem:[%s3 + $0x68] sm:$0xff] %vm599, %v1023
      %1040 = vst.msk [vmem:[%s3 + $0x70] sm:$0xff] %vm599, %v1024
      %1041 = vst.msk [vmem:[%s3 + $0x78] sm:$0xff] %vm599, %v1025
    $region33: #{tpu_custom_call.1} parent=1 // pred_fallthru
      _
    // Predicated region
    $region34: #{tpu_custom_call.1} parent=1 // pred_check
      _
    $region35: #{tpu_custom_call.1} parent=1 // pred_check_branch
      %1043 = sbr.rel (0) target = $region37
    $region36: #{tpu_custom_call.1} parent=1 // pred_region
      _
    $region37: #{tpu_custom_call.1} parent=1 // pred_fallthru
      _
    // Predicated region
    $region38: #{tpu_custom_call.1} parent=1 // pred_check
      _
    $region39: #{tpu_custom_call.1} parent=1 // pred_check_branch
      %1045 = sbr.rel (0) target = $region41
    $region40: #{tpu_custom_call.1} parent=1 // pred_region
      _
    $region41: #{tpu_custom_call.1} parent=1 // pred_fallthru
      _
    %1046 = vsyncpa [#allocation6], 1
    %1047 = vsyncpa [#allocation8], 1

</llo_original>
